<compile_context>
chip_gen: v7x
topology: tpu7x:2x2x1
jax: 0.10.0
libtpu: 0.0.40
codegen_flags: <defaults>
</compile_context>

<pallas_src>
import jax
import jax.numpy as jnp
from jax.experimental import pallas as pl
from jax.experimental.pallas import tpu as pltpu

C_IN = 256   # fixed by nn.Conv2d(256, 4, kernel_size=1)
C_OUT = 4


def _conv1x1_kernel(x_ref, w_ref, b_ref, o_ref):
    # x_ref: (C_IN, t_hw)  w_ref: (C_OUT, C_IN)  b_ref: (C_OUT, 1)
    # o_ref: (C_OUT, t_hw)
    acc = jnp.dot(w_ref[...], x_ref[...], preferred_element_type=jnp.float32)
    o_ref[...] = (acc + b_ref[...]).astype(o_ref.dtype)


def conv1x1_pallas(feat_nchw, weight, bias, *, t_hw_max=8192):
    """1x1 conv head on NCHW features: [N, 256, H, W] -> [N, 4, H, W].

    weight: (C_OUT, C_IN), bias: (C_OUT,)  (PyTorch conv weight [4,256,1,1]
    squeezed to [4,256]).
    """
    N, C, H, W = feat_nchw.shape
    assert C == C_IN
    HW = H * W
    x = feat_nchw.reshape(N, C, HW)      # contiguous view, no HBM pass

    if HW <= t_hw_max:
        # Single full-width tile: block equals the full dim, so no 128-multiple
        # requirement and no spatial padding pass.
        t_hw = HW
        HW_pad = HW
    else:
        t_hw = t_hw_max                   # multiple of 128
        HW_pad = pl.cdiv(HW, t_hw) * t_hw
        if HW_pad != HW:
            x = jnp.pad(x, ((0, 0), (0, 0), (0, HW_pad - HW)))

    b2 = bias.reshape(C_OUT, 1).astype(jnp.float32)

    out = pl.pallas_call(
        _conv1x1_kernel,
        out_shape=jax.ShapeDtypeStruct((N, C_OUT, HW_pad), feat_nchw.dtype),
        grid=(N, HW_pad // t_hw),
        in_specs=[
            # N squeezed out; channels on sublanes (256 % 8 == 0), HW on lanes.
            pl.BlockSpec((None, C_IN, t_hw), lambda n, j: (n, 0, j)),
            pl.BlockSpec((C_OUT, C_IN), lambda n, j: (0, 0)),
            pl.BlockSpec((C_OUT, 1), lambda n, j: (0, 0)),
        ],
        out_specs=pl.BlockSpec((None, C_OUT, t_hw), lambda n, j: (n, 0, j)),
        compiler_params=pltpu.CompilerParams(
            dimension_semantics=("parallel", "parallel"),
            vmem_limit_bytes=32 << 20,
        ),
    )(x, weight, b2)

    if HW_pad != HW:
        out = out[:, :, :HW]
    return out.reshape(N, C_OUT, H, W)


def lane_model_forward(features_nchw, params):
    """Forward of lane_model's defined head on backbone features."""
    return conv1x1_pallas(features_nchw, params["w"], params["b"])


def init_params(key):
    kw, kb = jax.random.split(key)
    # Matches Conv2d(256, 4, k=1) param shapes: weight [4,256,1,1] -> [4,256].
    fan_in = C_IN
    bound = 1.0 / jnp.sqrt(fan_in)
    w = jax.random.uniform(kw, (C_OUT, C_IN), jnp.float32, -bound, bound)
    b = jax.random.uniform(kb, (C_OUT,), jnp.float32, -bound, bound)
    return {"w": w, "b": b}


if __name__ == "__main__":
    key = jax.random.PRNGKey(0)
    kf, kp = jax.random.split(key)

    # Synthetic "backbone features": N=2, C=256 (required by the head), H=W=16.
    N, H, W = 2, 16, 16
    features = jax.random.normal(kf, (N, C_IN, H, W), jnp.float32)
    params = init_params(kp)

    out = lane_model_forward(features, params)
    out = jax.block_until_ready(out)
    assert out.shape == (N, C_OUT, H, W), out.shape

    # Reference check (plain JAX 1x1 conv == per-pixel matmul over channels).
    ref = (jnp.einsum("nchw,oc->nohw", features, params["w"])
           + params["b"][None, :, None, None])
    assert jnp.allclose(out, ref, atol=1e-4, rtol=1e-4)

    print("KERNEL_OK")
</pallas_src>

<mosaic_0001>
module attributes {stable_mosaic.version = 11 : i64} {
  func.func @_conv1x1_kernel(%arg0: i32, %arg1: i32, %arg2: memref<1x256x256xf32, #tpu.memory_space<vmem>>, %arg3: memref<4x256xf32, #tpu.memory_space<vmem>>, %arg4: memref<4x1xf32, #tpu.memory_space<vmem>>, %arg5: memref<1x4x256xf32, #tpu.memory_space<vmem>>) attributes {dimension_semantics = [#tpu.dimension_semantics<parallel>, #tpu.dimension_semantics<parallel>], iteration_bounds = array<i64: 2, 1>, scalar_prefetch = 0 : i64, scratch_operands = 0 : i64, tpu.core_type = #tpu.core_type<tc>, window_params = [{transform_indices = @transform_0, window_bounds = array<i64: 1, 256, 256>}, {pipeline_mode = #tpu.pipeline_mode<synchronous>, transform_indices = @transform_1, window_bounds = array<i64: 4, 256>}, {pipeline_mode = #tpu.pipeline_mode<synchronous>, transform_indices = @transform_2, window_bounds = array<i64: 4, 1>}, {transform_indices = @transform_3, window_bounds = array<i64: 1, 4, 256>}]} {
    %c0 = arith.constant 0 : index
    %c0_0 = arith.constant 0 : index
    %0 = vector.load %arg3[%c0, %c0_0] : memref<4x256xf32, #tpu.memory_space<vmem>>, vector<4x256xf32>
    %c0_1 = arith.constant 0 : index
    %c0_2 = arith.constant 0 : index
    %c0_3 = arith.constant 0 : index
    %1 = vector.load %arg2[%c0_1, %c0_2, %c0_3] : memref<1x256x256xf32, #tpu.memory_space<vmem>>, vector<1x256x256xf32>
    %2 = vector.shape_cast %1 : vector<1x256x256xf32> to vector<256x256xf32>
    %cst = arith.constant dense<0.000000e+00> : vector<4x256xf32>
    %3 = tpu.matmul %0, %2, %cst {dimension_numbers = #tpu.dot_dimension_numbers<[1], [0], [0], [1], [0, 0, 1, 1], [], []>} : vector<4x256xf32>, vector<256x256xf32>, vector<4x256xf32> -> vector<4x256xf32>
    %c0_4 = arith.constant 0 : index
    %c0_5 = arith.constant 0 : index
    %4 = vector.load %arg4[%c0_4, %c0_5] : memref<4x1xf32, #tpu.memory_space<vmem>>, vector<4x1xf32>
    %5 = vector.broadcast %4 : vector<4x1xf32> to vector<4x256xf32>
    %6 = arith.addf %3, %5 : vector<4x256xf32>
    %c0_6 = arith.constant 0 : index
    %c0_7 = arith.constant 0 : index
    %c0_8 = arith.constant 0 : index
    %7 = vector.load %arg5[%c0_6, %c0_7, %c0_8] : memref<1x4x256xf32, #tpu.memory_space<vmem>>, vector<1x4x256xf32>
    %8 = vector.shape_cast %7 : vector<1x4x256xf32> to vector<4x256xf32>
    %9 = vector.shape_cast %6 : vector<4x256xf32> to vector<1x4x256xf32>
    tpu.vector_store %arg5[%c0_6, %c0_7, %c0_8], %9 {strides = array<i32>} : memref<1x4x256xf32, #tpu.memory_space<vmem>>, vector<1x4x256xf32>,
    return
  }
  func.func @transform_0(%arg0: i32, %arg1: i32) -> (i32, i32, i32) {
    %c0_i32 = arith.constant 0 : i32
    %c0_i32_0 = arith.constant 0 : i32
    return %arg0, %c0_i32, %arg1 : i32, i32, i32
  }
  func.func @transform_1(%arg0: i32, %arg1: i32) -> (i32, i32) {
    %c0_i32 = arith.constant 0 : i32
    %c0_i32_0 = arith.constant 0 : i32
    %c0_i32_1 = arith.constant 0 : i32
    return %c0_i32, %c0_i32_0 : i32, i32
  }
  func.func @transform_2(%arg0: i32, %arg1: i32) -> (i32, i32) {
    %c0_i32 = arith.constant 0 : i32
    %c0_i32_0 = arith.constant 0 : i32
    %c0_i32_1 = arith.constant 0 : i32
    return %c0_i32, %c0_i32_0 : i32, i32
  }
  func.func @transform_3(%arg0: i32, %arg1: i32) -> (i32, i32, i32) {
    %c0_i32 = arith.constant 0 : i32
    %c0_i32_0 = arith.constant 0 : i32
    return %arg0, %c0_i32, %arg1 : i32, i32, i32
  }
}

</mosaic_0001>

<llo_original>
// kernel: tpu_custom_call.1
$region0: #{tpu_custom_call.1}
  #allocation0 [shape = 'u32[]', space=smem, size = 0x4, offset = 0x4, fixed_abs, tag = 'smem constant byte address 0x4 - core index']
  #allocation1 [shape = 'u32[144,128]{1,0:T(1,128)}', space=vmem, size = 0x12000, scoped, tag = 'internal scratch']
  %s0 = inlined_call_operand.hbm [shape: f32[2,256,256], index: 0, kind: input, shape index: {}]
  %s1 = inlined_call_operand.vmem [shape: f32[4,256], index: 1, kind: input, shape index: {}]
  %s2 = inlined_call_operand.vmem [shape: f32[4,1], index: 2, kind: input, shape index: {}]
  %s3 = inlined_call_operand.hbm [shape: f32[2,4,256], index: 3, kind: output, shape index: {}]
  %s4 = sld [smem:[#allocation0]]
  $region49: #{tpu_custom_call.1} parent=0
    _
  %s6 = ssub.s32 1, %s4
  %s7 = scalar_select 0, %s6, %s4
  $region1: #{tpu_custom_call.1} parent=0
    #allocation2 [shape = 'u8[524288]{0}', space=vmem, size = 0x80000, scoped, tag = 'input window, operand 0']
    #allocation3 [shape = 's32[2]{0}', space=sflag, size = 0x8, scoped, tag = 'scoped memory for tpu_custom_call.1']
    #allocation4 [shape = 's32[2]{0}', space=sflag, size = 0x8, scoped, tag = 'scoped memory for tpu_custom_call.1']
    #allocation5 [shape = 'u8[8192]{0}', space=vmem, size = 0x2000, scoped, tag = 'output window, operand 0']
    %8 = vsyncpa [#allocation3], 0
    %s9 = scalar_lea.sflag [#allocation3], 1
    %10 = vsyncpa %s9, 0
    %11 = vsyncpa [#allocation4], 0
    %s12 = scalar_lea.sflag [#allocation4], 1
    %13 = vsyncpa %s12, 0
    loop: start=0, step=1, limit=4
    $region2: #{tpu_custom_call.1} parent=1 // loop_pre_header
      _
    $region3: #{tpu_custom_call.1} parent=1 // loop_header
      %s15 = sphi 0, %s19
      %p16 = scmp.ge.s32.totalorder %s15, 4
      %s22 = sphi 0, %s34
      %s23 = sphi 0, %s30
      %s24 = sphi 0, %s22
      %s25 = sphi 0, %s23
      %s26 = sphi 0, %s24
      %s27 = sphi 0, %s25
      %s39 = sphi 0, %s41
      %s42 = sphi 0, %s39
      %s43 = sphi 0, %s42
      %s59 = sphi 0, %s43
      %s63 = sphi 0, %s63
      %s65 = sphi 0, %s63
      %s66 = sphi 0, %s65
      %s80 = sphi 0, %s66
      %s84 = sphi 0, %s84
      %s86 = sphi 0, %s84
      %s87 = sphi 0, %s86
      %s101 = sphi 0, %s87
      %s109 = sphi 0, %s111
      %s112 = sphi 0, %s109
      %s113 = sphi 0, %s112
      %s129 = sphi 0, %s113
    $region4: #{tpu_custom_call.1} parent=1 // loop_header_branch
      %18 = sbr.rel (%p16) target = $region8
    $region5: #{tpu_custom_call.1} parent=1 // loop_body
      %s20 = ssub.s32 %s15, 1
      %s21 = ssub.s32 %s15, 2
      %s28 = sadd.s32 1, %s23
      %p29 = scmp.ge.s32.totalorder %s28, 1
      %s30 = scalar_select %p29, 0, %s28
      %s31 = sadd.s32 1, %s22
      %s32 = scalar_select %p29, %s31, %s22
      %p33 = scmp.ge.s32.totalorder %s32, 2
      %s34 = scalar_select %p33, 0, %s32
      %s35 = ssub.s32 %s22, %s34
      %s36 = ssub.s32 %s23, %s30
      %s37 = sor.u32 %s35, %s36
      %p38 = scmp.eq.s32.totalorder %s37, 0
      %s40 = sadd.s32 %s39, 1
      %s41 = scalar_select %p38, %s39, %s40
      %p44 = pneg %p38
      %p45 = scmp.eq.s32.totalorder %s15, 1
      %p46 = por %p44, %p45
      %p47 = scmp.ne.s32.totalorder %s39, %s42
      %p48 = scmp.eq.s32.totalorder %s15, 0
      %p49 = por %p47, %p48
      %p50 = scmp.ne.s32.totalorder %s39, %s42
      %p51 = scmp.eq.s32.totalorder %s20, 1
      %p52 = por %p50, %p51
      %p53 = scmp.ne.s32.totalorder %s42, %s43
      %p54 = scmp.eq.s32.totalorder %s20, 0
      %p55 = por %p53, %p54
      %p56 = scmp.ne.s32.totalorder %s42, %s43
      %p57 = scmp.eq.s32.totalorder %s21, 1
      %p58 = por %p56, %p57
      %p60 = scmp.ne.s32.totalorder %s43, %s59
      %p61 = scmp.eq.s32.totalorder %s21, 0
      %p62 = por %p60, %p61
      %s64 = sadd.s32 %s63, 1
      %p67 = scmp.eq.s32.totalorder %s15, 1
      %p68 = scmp.ne.s32.totalorder %s63, %s65
      %p69 = scmp.eq.s32.totalorder %s15, 0
      %p70 = por %p68, %p69
      %p71 = scmp.ne.s32.totalorder %s63, %s65
      %p72 = scmp.eq.s32.totalorder %s20, 1
      %p73 = por %p71, %p72
      %p74 = scmp.ne.s32.totalorder %s65, %s66
      %p75 = scmp.eq.s32.totalorder %s20, 0
      %p76 = por %p74, %p75
      %p77 = scmp.ne.s32.totalorder %s65, %s66
      %p78 = scmp.eq.s32.totalorder %s21, 1
      %p79 = por %p77, %p78
      %p81 = scmp.ne.s32.totalorder %s66, %s80
      %p82 = scmp.eq.s32.totalorder %s21, 0
      %p83 = por %p81, %p82
      %s85 = sadd.s32 %s84, 1
      %p88 = scmp.eq.s32.totalorder %s15, 1
      %p89 = scmp.ne.s32.totalorder %s84, %s86
      %p90 = scmp.eq.s32.totalorder %s15, 0
      %p91 = por %p89, %p90
      %p92 = scmp.ne.s32.totalorder %s84, %s86
      %p93 = scmp.eq.s32.totalorder %s20, 1
      %p94 = por %p92, %p93
      %p95 = scmp.ne.s32.totalorder %s86, %s87
      %p96 = scmp.eq.s32.totalorder %s20, 0
      %p97 = por %p95, %p96
      %p98 = scmp.ne.s32.totalorder %s86, %s87
      %p99 = scmp.eq.s32.totalorder %s21, 1
      %p100 = por %p98, %p99
      %p102 = scmp.ne.s32.totalorder %s87, %s101
      %p103 = scmp.eq.s32.totalorder %s21, 0
      %p104 = por %p102, %p103
      %s105 = ssub.s32 %s22, %s34
      %s106 = ssub.s32 %s23, %s30
      %s107 = sor.u32 %s105, %s106
      %p108 = scmp.eq.s32.totalorder %s107, 0
      %s110 = sadd.s32 %s109, 1
      %s111 = scalar_select %p108, %s109, %s110
      %p114 = pneg %p108
      %p115 = scmp.eq.s32.totalorder %s15, 1
      %p116 = por %p114, %p115
      %p117 = scmp.ne.s32.totalorder %s109, %s112
      %p118 = scmp.eq.s32.totalorder %s15, 0
      %p119 = por %p117, %p118
      %p120 = scmp.ne.s32.totalorder %s109, %s112
      %p121 = scmp.eq.s32.totalorder %s20, 1
      %p122 = por %p120, %p121
      %p123 = scmp.ne.s32.totalorder %s112, %s113
      %p124 = scmp.eq.s32.totalorder %s20, 0
      %p125 = por %p123, %p124
      %p126 = scmp.ne.s32.totalorder %s112, %s113
      %p127 = scmp.eq.s32.totalorder %s21, 1
      %p128 = por %p126, %p127
      %p130 = scmp.ne.s32.totalorder %s113, %s129
      %p131 = scmp.eq.s32.totalorder %s21, 0
      %p132 = por %p130, %p131
      %p133 = scmp.le.s32.totalorder 1, %s15
      %p134 = scmp.lt.s32.totalorder %s15, 3
      %p135 = pnand %p133, %p134
      %p136 = pneg %p135
      // Predicated region
      $region9: #{tpu_custom_call.1} parent=5 // pred_check
        _
      $region10: #{tpu_custom_call.1} parent=5 // pred_check_branch
        %138 = sbr.rel (%p135) target = $region12
      $region11: #{tpu_custom_call.1} parent=5 // pred_region
        %s139 = ssub.s32 %s15, 1
        // Predicated region
        $region13: #{tpu_custom_call.1} parent=11 // pred_check
          %p140 = pneg %p76
        $region14: #{tpu_custom_call.1} parent=11 // pred_check_branch
          %142 = sbr.rel (%p140) target = $region16
        $region15: #{tpu_custom_call.1} parent=11 // pred_region
          _
        $region16: #{tpu_custom_call.1} parent=11 // pred_fallthru
          _
        // Predicated region
        $region17: #{tpu_custom_call.1} parent=11 // pred_check
          %p143 = pneg %p97
        $region18: #{tpu_custom_call.1} parent=11 // pred_check_branch
          %145 = sbr.rel (%p143) target = $region20
        $region19: #{tpu_custom_call.1} parent=11 // pred_region
          _
        $region20: #{tpu_custom_call.1} parent=11 // pred_fallthru
          _
      $region12: #{tpu_custom_call.1} parent=5 // pred_fallthru
        _
      %p146 = scmp.lt.s32.totalorder %s15, 2
      // Predicated region
      $region21: #{tpu_custom_call.1} parent=5 // pred_check
        %p147 = pneg %p146
      $region22: #{tpu_custom_call.1} parent=5 // pred_check_branch
        %149 = sbr.rel (%p147) target = $region24
      $region23: #{tpu_custom_call.1} parent=5 // pred_region
        // Predicated region
        $region25: #{tpu_custom_call.1} parent=23 // pred_check
          %p150 = pneg %p49
        $region26: #{tpu_custom_call.1} parent=23 // pred_check_branch
          %152 = sbr.rel (%p150) target = $region28
        $region27: #{tpu_custom_call.1} parent=23 // pred_region
          %s153 = sand.u32 %s39, 1
          %s154 = scalar_lea.sflag [#allocation3], %s153
          %s155 = sand.u32 %s39, 1
          %s156 = smul.addr %s155, 512
          %s157 = scalar_lea.vmem [#allocation2], %s156
          %s158 = smul.u32 2, %s23
          %s160 = ssub.s32 8192, 8192
          %161 = vsyncadd %s154, %s160
          %s162 = smul.addr %s22, 64
          %s163 = sadd.s32 %s158, %s162
          %s164 = smul.addr %s163, 128
          %s165 = scalar_lea.hbm %s0, %s164
          %s166 = sshll.u32 %s157, 4
          %s167 = int_to_ptr.vmem [resolvable:$true] %s166
          %172 = dma.hbm_to_vmem [thread:$0]  %s165, 8192, %s167, %s154, 256, 256, 16
        $region28: #{tpu_custom_call.1} parent=23 // pred_fallthru
          _
      $region24: #{tpu_custom_call.1} parent=5 // pred_fallthru
        _
      %p173 = scmp.le.s32.totalorder 1, %s15
      %p174 = scmp.lt.s32.totalorder %s15, 3
      %p175 = pnand %p173, %p174
      %p176 = pneg %p175
      // Predicated region
      $region29: #{tpu_custom_call.1} parent=5 // pred_check
        _
      $region30: #{tpu_custom_call.1} parent=5 // pred_check_branch
        %178 = sbr.rel (%p175) target = $region32
      $region31: #{tpu_custom_call.1} parent=5 // pred_region
        %s179 = ssub.s32 %s15, 1
        %s180 = sand.u32 %s42, 1
        %s181 = scalar_lea.sflag [#allocation3], %s180
        %s182 = sand.u32 %s42, 1
        %s183 = smul.addr %s182, 512
        %s184 = scalar_lea.vmem [#allocation2], %s183
        // Predicated region
        $region33: #{tpu_custom_call.1} parent=31 // pred_check
          %p185 = pneg %p55
        $region34: #{tpu_custom_call.1} parent=31 // pred_check_branch
          %187 = sbr.rel (%p185) target = $region36
        $region35: #{tpu_custom_call.1} parent=31 // pred_region
          %188 = dma.done %s181, 8192
        $region36: #{tpu_custom_call.1} parent=31 // pred_fallthru
          _
        %s189 = sand.u32 %s42, 1
        %s190 = scalar_lea.sflag [#allocation3], %s189
        %s191 = sand.u32 %s42, 1
        %s192 = smul.addr %s191, 512
        %s193 = scalar_lea.vmem [#allocation2], %s192
        %p194 = pneg %p55
        %p195 = pneg %p52
        %p196 = pneg %p76
        %p197 = pneg %p73
        %p198 = pneg %p97
        %p199 = pneg %p94
        %p200 = pneg %p125
        %p201 = pneg %p122
        %s202 = sand.u32 %s112, 1
        %s203 = scalar_lea.sflag [#allocation4], %s202
        %s204 = sand.u32 %s112, 1
        %s205 = smul.addr %s204, 8
        %s206 = scalar_lea.vmem [#allocation5], %s205
        %s207 = smul.u32 2, %s25
        %s208 = smul.u32 2, %s25
        %v209 = vld [vmem:[%s1] sm:$0xff]
        %v210 = vld [vmem:[%s184] sm:$0xff]
        %v211 = vld [vmem:[%s184 + $0x8] sm:$0xff]
        %v212 = vld [vmem:[%s184 + $0x10] sm:$0xff]
        %v213 = vld [vmem:[%s184 + $0x18] sm:$0xff]
        %v214 = vld [vmem:[%s184 + $0x20] sm:$0xff]
        %v215 = vld [vmem:[%s184 + $0x28] sm:$0xff]
        %v216 = vld [vmem:[%s184 + $0x30] sm:$0xff]
        %v217 = vld [vmem:[%s184 + $0x38] sm:$0xff]
        %v218 = vld [vmem:[%s184 + $0x40] sm:$0xff]
        %v219 = vld [vmem:[%s184 + $0x48] sm:$0xff]
        %v220 = vld [vmem:[%s184 + $0x50] sm:$0xff]
        %v221 = vld [vmem:[%s184 + $0x58] sm:$0xff]
        %v222 = vld [vmem:[%s184 + $0x60] sm:$0xff]
        %v223 = vld [vmem:[%s184 + $0x68] sm:$0xff]
        %v224 = vld [vmem:[%s184 + $0x70] sm:$0xff]
        %v225 = vld [vmem:[%s184 + $0x78] sm:$0xff]
        %v226 = vld [vmem:[%s184 + $0x80] sm:$0xff]
        %v227 = vld [vmem:[%s184 + $0x88] sm:$0xff]
        %v228 = vld [vmem:[%s184 + $0x90] sm:$0xff]
        %v229 = vld [vmem:[%s184 + $0x98] sm:$0xff]
        %v230 = vld [vmem:[%s184 + $0xa0] sm:$0xff]
        %v231 = vld [vmem:[%s184 + $0xa8] sm:$0xff]
        %v232 = vld [vmem:[%s184 + $0xb0] sm:$0xff]
        %v233 = vld [vmem:[%s184 + $0xb8] sm:$0xff]
        %v234 = vld [vmem:[%s184 + $0xc0] sm:$0xff]
        %v235 = vld [vmem:[%s184 + $0xc8] sm:$0xff]
        %v236 = vld [vmem:[%s184 + $0xd0] sm:$0xff]
        %v237 = vld [vmem:[%s184 + $0xd8] sm:$0xff]
        %v238 = vld [vmem:[%s184 + $0xe0] sm:$0xff]
        %v239 = vld [vmem:[%s184 + $0xe8] sm:$0xff]
        %v240 = vld [vmem:[%s184 + $0xf0] sm:$0xff]
        %v241 = vld [vmem:[%s184 + $0xf8] sm:$0xff]
        %v242 = vld [vmem:[%s184 + $0x100] sm:$0xff]
        %v243 = vld [vmem:[%s184 + $0x108] sm:$0xff]
        %v244 = vld [vmem:[%s184 + $0x110] sm:$0xff]
        %v245 = vld [vmem:[%s184 + $0x118] sm:$0xff]
        %v246 = vld [vmem:[%s184 + $0x120] sm:$0xff]
        %v247 = vld [vmem:[%s184 + $0x128] sm:$0xff]
        %v248 = vld [vmem:[%s184 + $0x130] sm:$0xff]
        %v249 = vld [vmem:[%s184 + $0x138] sm:$0xff]
        %v250 = vld [vmem:[%s184 + $0x140] sm:$0xff]
        %v251 = vld [vmem:[%s184 + $0x148] sm:$0xff]
        %v252 = vld [vmem:[%s184 + $0x150] sm:$0xff]
        %v253 = vld [vmem:[%s184 + $0x158] sm:$0xff]
        %v254 = vld [vmem:[%s184 + $0x160] sm:$0xff]
        %v255 = vld [vmem:[%s184 + $0x168] sm:$0xff]
        %v256 = vld [vmem:[%s184 + $0x170] sm:$0xff]
        %v257 = vld [vmem:[%s184 + $0x178] sm:$0xff]
        %v258 = vld [vmem:[%s184 + $0x180] sm:$0xff]
        %v259 = vld [vmem:[%s184 + $0x188] sm:$0xff]
        %v260 = vld [vmem:[%s184 + $0x190] sm:$0xff]
        %v261 = vld [vmem:[%s184 + $0x198] sm:$0xff]
        %v262 = vld [vmem:[%s184 + $0x1a0] sm:$0xff]
        %v263 = vld [vmem:[%s184 + $0x1a8] sm:$0xff]
        %v264 = vld [vmem:[%s184 + $0x1b0] sm:$0xff]
        %v265 = vld [vmem:[%s184 + $0x1b8] sm:$0xff]
        %v266 = vld [vmem:[%s184 + $0x1c0] sm:$0xff]
        %v267 = vld [vmem:[%s184 + $0x1c8] sm:$0xff]
        %v268 = vld [vmem:[%s184 + $0x1d0] sm:$0xff]
        %v269 = vld [vmem:[%s184 + $0x1d8] sm:$0xff]
        %v270 = vld [vmem:[%s184 + $0x1e0] sm:$0xff]
        %v271 = vld [vmem:[%s184 + $0x1e8] sm:$0xff]
        %v272 = vld [vmem:[%s184 + $0x1f0] sm:$0xff]
        %v273 = vld [vmem:[%s184 + $0x1f8] sm:$0xff]
        %v274 = vld [vmem:[%s2] sm:$0xf]
        %276 = vset.pattern.permute.xlu0 0
        %277 = vperm.xlu0 %276, %v274
        %v278 = vpop.permute.xlu0 %277
        %v281 = vcombine.high %v209, %v209
        %283 = vmatprep.subr.mxu0 %v211
        %284 = vmatpush1.msra.mxu0 %v210
        %285 = vmatprep.subr.mxu0 %v213
        %286 = vmatpush1.msra.mxu0 %v212
        %287 = vmatprep.subr.mxu0 %v215
        %288 = vmatpush1.msra.mxu0 %v214
        %289 = vmatprep.subr.mxu0 %v217
        %290 = vmatpush1.msra.mxu0 %v216
        %291 = vmatprep.subr.mxu0 %v219
        %292 = vmatpush1.msra.mxu0 %v218
        %293 = vmatprep.subr.mxu0 %v221
        %294 = vmatpush1.msra.mxu0 %v220
        %295 = vmatprep.subr.mxu0 %v223
        %296 = vmatpush1.msra.mxu0 %v222
        %297 = vmatprep.subr.mxu0 %v225
        %298 = vmatpush1.msra.mxu0 %v224
        %299 = vmatprep.subr.mxu0 %v227
        %300 = vmatpush1.msra.mxu0 %v226
        %301 = vmatprep.subr.mxu0 %v229
        %302 = vmatpush1.msra.mxu0 %v228
        %303 = vmatprep.subr.mxu0 %v231
        %304 = vmatpush1.msra.mxu0 %v230
        %305 = vmatprep.subr.mxu0 %v233
        %306 = vmatpush1.msra.mxu0 %v232
        %307 = vmatprep.subr.mxu0 %v235
        %308 = vmatpush1.msra.mxu0 %v234
        %309 = vmatprep.subr.mxu0 %v237
        %310 = vmatpush1.msra.mxu0 %v236
        %311 = vmatprep.subr.mxu0 %v239
        %312 = vmatpush1.msra.mxu0 %v238
        %313 = vmatprep.subr.mxu0 %v241
        %314 = vmatpush1.msra.mxu0 %v240
        %315 = vmatprep.subr.mxu0 %v243
        %316 = vmatpush1.msra.mxu0 %v242
        %317 = vmatprep.subr.mxu0 %v245
        %318 = vmatpush1.msra.mxu0 %v244
        %319 = vmatprep.subr.mxu0 %v247
        %320 = vmatpush1.msra.mxu0 %v246
        %321 = vmatprep.subr.mxu0 %v249
        %322 = vmatpush1.msra.mxu0 %v248
        %323 = vmatprep.subr.mxu0 %v251
        %324 = vmatpush1.msra.mxu0 %v250
        %325 = vmatprep.subr.mxu0 %v253
        %326 = vmatpush1.msra.mxu0 %v252
        %327 = vmatprep.subr.mxu0 %v255
        %328 = vmatpush1.msra.mxu0 %v254
        %329 = vmatprep.subr.mxu0 %v257
        %330 = vmatpush1.msra.mxu0 %v256
        %331 = vmatprep.subr.mxu0 %v259
        %332 = vmatpush1.msra.mxu0 %v258
        %333 = vmatprep.subr.mxu0 %v261
        %334 = vmatpush1.msra.mxu0 %v260
        %335 = vmatprep.subr.mxu0 %v263
        %336 = vmatpush1.msra.mxu0 %v262
        %337 = vmatprep.subr.mxu0 %v265
        %338 = vmatpush1.msra.mxu0 %v264
        %339 = vmatprep.subr.mxu0 %v267
        %340 = vmatpush1.msra.mxu0 %v266
        %341 = vmatprep.subr.mxu0 %v269
        %342 = vmatpush1.msra.mxu0 %v268
        %343 = vmatprep.subr.mxu0 %v271
        %344 = vmatpush1.msra.mxu0 %v270
        %345 = vmatprep.subr.mxu0 %v273
        %346 = vmatpush1.msra.mxu0 %v272
        %347 = vmatprep.mubr.f32.mxu0 %v281
        %348 = vmatmul.mubr.f32.gmra.mrb[0].mxu0 %v209
        %v349 = vpop.f32.mrb[0].mxu0
        %v350 = vadd.f32 %v278, %v349
        %v351 = vpop.f32.mrb[0].mxu0
        %v352 = vadd.f32 %v278, %v351
        %353 = vdwg.mxu0
        %v356 = vcombine.low %v350, %v352
        %358 = vst [vmem:[%s206] sm:$0xff] %v356
        %s359 = sand.u32 %s112, 1
        %s360 = scalar_lea.sflag [#allocation4], %s359
        %s361 = sand.u32 %s112, 1
        %s362 = smul.addr %s361, 8
        %s363 = scalar_lea.vmem [#allocation5], %s362
        // Predicated region
        $region37: #{tpu_custom_call.1} parent=31 // pred_check
          %p364 = pneg %p122
        $region38: #{tpu_custom_call.1} parent=31 // pred_check_branch
          %366 = sbr.rel (%p364) target = $region40
        $region39: #{tpu_custom_call.1} parent=31 // pred_region
          %s367 = smul.u32 2, %s25
          %s369 = ssub.s32 128, 128
          %370 = vsyncadd %s360, %s369
          %s371 = smul.addr %s24, 2
          %s372 = sadd.s32 %s367, %s371
          %s373 = smul.addr %s372, 64
          %s374 = scalar_lea.hbm %s3, %s373
          %s376 = sshll.u32 %s363, 4
          %s377 = int_to_ptr.vmem [resolvable:$true] %s376
          %379 = dma.vmem_to_hbm [thread:$0]  %s377, 128, %s374, %s360
        $region40: #{tpu_custom_call.1} parent=31 // pred_fallthru
          _
      $region32: #{tpu_custom_call.1} parent=5 // pred_fallthru
        _
      %p380 = scmp.le.s32.totalorder 2, %s15
      // Predicated region
      $region41: #{tpu_custom_call.1} parent=5 // pred_check
        %p381 = pneg %p380
      $region42: #{tpu_custom_call.1} parent=5 // pred_check_branch
        %383 = sbr.rel (%p381) target = $region44
      $region43: #{tpu_custom_call.1} parent=5 // pred_region
        %s384 = ssub.s32 %s15, 2
        // Predicated region
        $region45: #{tpu_custom_call.1} parent=43 // pred_check
          %p385 = pneg %p128
        $region46: #{tpu_custom_call.1} parent=43 // pred_check_branch
          %387 = sbr.rel (%p385) target = $region48
        $region47: #{tpu_custom_call.1} parent=43 // pred_region
          %s388 = sand.u32 %s113, 1
          %s389 = scalar_lea.sflag [#allocation4], %s388
          %s390 = sand.u32 %s113, 1
          %s391 = smul.addr %s390, 8
          %s392 = scalar_lea.vmem [#allocation5], %s391
          %393 = dma.done %s389, 128
        $region48: #{tpu_custom_call.1} parent=43 // pred_fallthru
          _
      $region44: #{tpu_custom_call.1} parent=5 // pred_fallthru
        _
    $region6: #{tpu_custom_call.1} parent=1 // loop_footer
      %s19 = sadd.s32 1, %s15
    $region7: #{tpu_custom_call.1} parent=1 // loop_footer_branch
      %14 = sbr.rel target = $region3
    $region8: #{tpu_custom_call.1} parent=1 // loop_exit
      _
    %394 = vsyncpa [#allocation3], 1
    %s395 = scalar_lea.sflag [#allocation3], 1
    %396 = vsyncpa %s395, 1
    %397 = vsyncpa [#allocation4], 1
    %s398 = scalar_lea.sflag [#allocation4], 1
    %399 = vsyncpa %s398, 1

</llo_original>
